<compile_context>
chip_gen: v7x
topology: tpu7x:2x2x1
jax: 0.10.0
libtpu: 0.0.40
codegen_flags: <defaults>
</compile_context>

<pallas_src>
import jax
import jax.numpy as jnp
from jax.experimental import pallas as pl
from jax.experimental.pallas import tpu as pltpu

_LANE = 128


def _round_up(x, m):
    return (x + m - 1) // m * m


def _head_kernel(x_ref, w1_ref, bb_ref, w2_ref, b2_ref, o_ref):
    """One (batch, H-band) tile per grid step.

    x_ref : (1, H+2, W, Kp)      bf16, W-im2col'd padded activations (whole image)
    w1_ref: (3, Kp, Cmid_p)      bf16, 3x3 conv weights (BN scale folded), per ky tap
    bb_ref: (1, Cmid_p)          f32, folded BN bias
    w2_ref: (Cmid_p, Cout_p)     f32, 1x1 conv weights
    b2_ref: (1, Cout_p)          f32, 1x1 conv bias
    o_ref : (1, tH, W, Cout_p)   f32, lane-dense output band
    """
    _, tH, W, Cout_p = o_ref.shape
    Kp = x_ref.shape[-1]
    Cmid_p = w1_ref.shape[-1]

    hb = pl.program_id(1)
    row0 = hb * tH  # first output row of this band (in padded-H coordinates: +ky below)

    # 3x3 conv == 3 H-shifted matmuls (W taps already folded into K by im2col).
    acc = jnp.zeros((tH * W, Cmid_p), jnp.float32)
    for ky in range(3):
        xk = x_ref[0, pl.ds(row0 + ky, tH), :, :]          # (tH, W, Kp), major-axis slice
        acc += jnp.dot(xk.reshape(tH * W, Kp), w1_ref[ky],
                       preferred_element_type=jnp.float32)

    # Folded BatchNorm bias (scale already in w1) + LeakyReLU(0.1), f32 epilogue.
    y = acc + bb_ref[0]
    y = jnp.where(y > 0.0, y, 0.1 * y)

    # 1x1 conv == channel matmul + bias (small -> keep f32 for accuracy).
    out = jnp.dot(y, w2_ref[...], preferred_element_type=jnp.float32) + b2_ref[0]
    o_ref[...] = out.reshape(1, tH, W, Cout_p).astype(o_ref.dtype)


def detection_head_forward(x_nchw, params, num_classes):
    """Forward pass matching the PyTorch DetectionHead (eval-mode BN folded).

    Args:
      x_nchw: (B, Cin, H, W) float32
      params: dict with w1 (3,3,Cin,2Cin) HWIO, bn_scale (2Cin,), bn_bias (2Cin,),
              w2 (2Cin, Cout), b2 (Cout,)
    Returns:
      (B, 3, H, W, 5 + num_classes) float32
    """
    pred_size = 4 + 1 + num_classes
    num_anchors = 3
    B, Cin, H, W = x_nchw.shape
    Cmid = 2 * Cin
    Cout = num_anchors * pred_size

    Kp = _round_up(3 * Cin, _LANE)       # im2col'd contraction dim of the 3x3 conv
    Cmid_p = _round_up(Cmid, _LANE)
    Cout_p = _round_up(Cout, _LANE)

    # H-band tiling (band rows are non-overlapping; the 1-row halo is handled by
    # slicing the resident per-image block inside the kernel).
    tH = 8 if H % 8 == 0 else H
    HB = H // tH

    # ---- activations: NCHW -> NHWC (bf16), 'same' pad, W-im2col, K pad ----
    x_nhwc = jnp.transpose(x_nchw, (0, 2, 3, 1)).astype(jnp.bfloat16)
    x_pad = jnp.pad(x_nhwc, ((0, 0), (1, 1), (1, 1), (0, 0)))
    # W-taps folded into the channel (lane) axis: x_w3[b,h,w, kx*Cin+ci] = x_pad[b,h,w+kx,ci]
    x_w3 = jnp.concatenate([x_pad[:, :, kx:kx + W, :] for kx in range(3)], axis=-1)
    if Kp > 3 * Cin:
        x_w3 = jnp.pad(x_w3, ((0, 0), (0, 0), (0, 0), (0, Kp - 3 * Cin)))
    # TODO(synk): fuse the pad/im2col into the kernel (halo masking) to avoid the
    # extra HBM pass over the activations; for YOLO head shapes they are small
    # relative to the conv weights, so this keeps the kernel relayout-free cheaply.

    # ---- weights: fold BN scale into conv1, reshape to im2col layout, pad, bf16 ----
    w1 = params["w1"] * params["bn_scale"][None, None, None, :]       # (3,3,Cin,Cmid)
    w1 = w1.reshape(3, 3 * Cin, Cmid)                                 # (ky, kx*Cin+ci, co)
    w1 = jnp.pad(w1, ((0, 0), (0, Kp - 3 * Cin), (0, Cmid_p - Cmid))).astype(jnp.bfloat16)

    bb = jnp.pad(params["bn_bias"], (0, Cmid_p - Cmid)).reshape(1, Cmid_p).astype(jnp.float32)
    w2 = jnp.pad(params["w2"], ((0, Cmid_p - Cmid), (0, Cout_p - Cout))).astype(jnp.float32)
    b2 = jnp.pad(params["b2"], (0, Cout_p - Cout)).reshape(1, Cout_p).astype(jnp.float32)

    # NOTE(v7x, 64 MiB VMEM): for real head channels use pl.Buffered(1) on the
    # constant-index weight specs or add a K grid axis; at these block sizes the
    # default double-buffering is far under every chip's scoped-VMEM limit.
    out_nhwc = pl.pallas_call(
        _head_kernel,
        out_shape=jax.ShapeDtypeStruct((B, H, W, Cout_p), jnp.float32),
        grid=(B, HB),
        in_specs=[
            pl.BlockSpec((1, H + 2, W, Kp), lambda b, hb: (b, 0, 0, 0)),   # resident per image
            pl.BlockSpec((3, Kp, Cmid_p), lambda b, hb: (0, 0, 0)),
            pl.BlockSpec((1, Cmid_p), lambda b, hb: (0, 0)),
            pl.BlockSpec((Cmid_p, Cout_p), lambda b, hb: (0, 0)),
            pl.BlockSpec((1, Cout_p), lambda b, hb: (0, 0)),
        ],
        out_specs=pl.BlockSpec((1, tH, W, Cout_p), lambda b, hb: (b, hb, 0, 0)),
        compiler_params=pltpu.CompilerParams(
            dimension_semantics=("parallel", "parallel")),
    )(x_w3, w1, bb, w2, b2)

    # Slice off padded lanes; match torch: view(B,3,pred,H,W).permute(0,1,3,4,2)
    out = out_nhwc[..., :Cout].reshape(B, H, W, num_anchors, pred_size)
    return jnp.transpose(out, (0, 3, 1, 2, 4))


def _reference_forward(x_nchw, params, num_classes):
    """Pure-JAX reference (lax.conv, f32) using the same bf16-rounded conv1 inputs."""
    pred_size = 4 + 1 + num_classes
    B, Cin, H, W = x_nchw.shape
    x = jnp.transpose(x_nchw, (0, 2, 3, 1)).astype(jnp.bfloat16).astype(jnp.float32)
    w1 = (params["w1"] * params["bn_scale"][None, None, None, :]
          ).astype(jnp.bfloat16).astype(jnp.float32)
    y = jax.lax.conv_general_dilated(
        x, w1, window_strides=(1, 1), padding="SAME",
        dimension_numbers=("NHWC", "HWIO", "NHWC"),
        precision=jax.lax.Precision.HIGHEST)
    y = y + params["bn_bias"]
    y = jnp.where(y > 0, y, 0.1 * y)
    y = jnp.einsum("bhwc,co->bhwo", y, params["w2"],
                   precision=jax.lax.Precision.HIGHEST) + params["b2"]
    y = y.reshape(B, H, W, 3, pred_size)
    return jnp.transpose(y, (0, 3, 1, 2, 4))


if __name__ == "__main__":
    # Small shapes: batch=2, in_channels=4, spatial=16x16, num_classes=3
    B, Cin, H, W = 2, 4, 16, 16
    num_classes = 3
    Cmid = 2 * Cin
    Cout = 3 * (4 + 1 + num_classes)

    key = jax.random.PRNGKey(0)
    k1, k2, k3, k4, k5, k6 = jax.random.split(key, 6)

    # Deterministic synthetic parameters (BatchNorm folded to scale/bias, eval mode).
    params = {
        "w1": jax.random.normal(k1, (3, 3, Cin, Cmid), jnp.float32) * 0.1,
        "bn_scale": 1.0 + 0.1 * jax.random.normal(k2, (Cmid,), jnp.float32),
        "bn_bias": 0.1 * jax.random.normal(k3, (Cmid,), jnp.float32),
        "w2": jax.random.normal(k4, (Cmid, Cout), jnp.float32) * 0.1,
        "b2": 0.1 * jax.random.normal(k5, (Cout,), jnp.float32),
    }
    x = jax.random.normal(k6, (B, Cin, H, W), jnp.float32)

    out = detection_head_forward(x, params, num_classes)
    out = jax.block_until_ready(out)
    assert out.shape == (B, 3, H, W, 4 + 1 + num_classes), out.shape

    ref = _reference_forward(x, params, num_classes)
    err = float(jnp.max(jnp.abs(out - ref)))
    assert jnp.allclose(out, ref, atol=2e-3, rtol=2e-3), err

    print("KERNEL_OK")
</pallas_src>

<mosaic_0001>
module attributes {stable_mosaic.version = 11 : i64} {
  func.func @_head_kernel(%arg0: i32, %arg1: i32, %arg2: memref<1x18x16x128xbf16, #tpu.memory_space<vmem>>, %arg3: memref<3x128x128xbf16, #tpu.memory_space<vmem>>, %arg4: memref<1x128xf32, #tpu.memory_space<vmem>>, %arg5: memref<128x128xf32, #tpu.memory_space<vmem>>, %arg6: memref<1x128xf32, #tpu.memory_space<vmem>>, %arg7: memref<1x8x16x128xf32, #tpu.memory_space<vmem>>) attributes {dimension_semantics = [#tpu.dimension_semantics<parallel>, #tpu.dimension_semantics<parallel>], iteration_bounds = array<i64: 2, 2>, scalar_prefetch = 0 : i64, scratch_operands = 0 : i64, tpu.core_type = #tpu.core_type<tc>, window_params = [{transform_indices = @transform_0, window_bounds = array<i64: 1, 18, 16, 128>}, {pipeline_mode = #tpu.pipeline_mode<synchronous>, transform_indices = @transform_1, window_bounds = array<i64: 3, 128, 128>}, {pipeline_mode = #tpu.pipeline_mode<synchronous>, transform_indices = @transform_2, window_bounds = array<i64: 1, 128>}, {pipeline_mode = #tpu.pipeline_mode<synchronous>, transform_indices = @transform_3, window_bounds = array<i64: 128, 128>}, {pipeline_mode = #tpu.pipeline_mode<synchronous>, transform_indices = @transform_4, window_bounds = array<i64: 1, 128>}, {transform_indices = @transform_5, window_bounds = array<i64: 1, 8, 16, 128>}]} {
    %c8_i32 = arith.constant 8 : i32
    %0 = arith.muli %arg1, %c8_i32 : i32
    %cst = arith.constant 0.000000e+00 : f32
    %1 = vector.broadcast %cst : f32 to vector<128x128xf32>
    %c0_i32 = arith.constant 0 : i32
    %2 = arith.addi %0, %c0_i32 : i32
    %c0 = arith.constant 0 : index
    %3 = arith.index_cast %2 : i32 to index
    %c0_0 = arith.constant 0 : index
    %c0_1 = arith.constant 0 : index
    %4 = vector.load %arg2[%c0, %3, %c0_0, %c0_1] : memref<1x18x16x128xbf16, #tpu.memory_space<vmem>>, vector<1x8x16x128xbf16>
    %5 = vector.shape_cast %4 : vector<1x8x16x128xbf16> to vector<8x16x128xbf16>
    %6 = vector.shape_cast %5 : vector<8x16x128xbf16> to vector<128x128xbf16>
    %c0_2 = arith.constant 0 : index
    %c0_3 = arith.constant 0 : index
    %c0_4 = arith.constant 0 : index
    %7 = vector.load %arg3[%c0_2, %c0_3, %c0_4] : memref<3x128x128xbf16, #tpu.memory_space<vmem>>, vector<1x128x128xbf16>
    %8 = vector.shape_cast %7 : vector<1x128x128xbf16> to vector<128x128xbf16>
    %cst_5 = arith.constant dense<0.000000e+00> : vector<128x128xf32>
    %9 = tpu.matmul %6, %8, %cst_5 {dimension_numbers = #tpu.dot_dimension_numbers<[1], [0], [0], [1], [0, 0, 1, 1], [], []>} : vector<128x128xbf16>, vector<128x128xbf16>, vector<128x128xf32> -> vector<128x128xf32>
    %10 = arith.addf %1, %9 : vector<128x128xf32>
    %c1_i32 = arith.constant 1 : i32
    %11 = arith.addi %0, %c1_i32 : i32
    %c0_6 = arith.constant 0 : index
    %12 = arith.index_cast %11 : i32 to index
    %c0_7 = arith.constant 0 : index
    %c0_8 = arith.constant 0 : index
    %13 = vector.load %arg2[%c0_6, %12, %c0_7, %c0_8] : memref<1x18x16x128xbf16, #tpu.memory_space<vmem>>, vector<1x8x16x128xbf16>
    %14 = vector.shape_cast %13 : vector<1x8x16x128xbf16> to vector<8x16x128xbf16>
    %15 = vector.shape_cast %14 : vector<8x16x128xbf16> to vector<128x128xbf16>
    %c1 = arith.constant 1 : index
    %c0_9 = arith.constant 0 : index
    %c0_10 = arith.constant 0 : index
    %16 = vector.load %arg3[%c1, %c0_9, %c0_10] : memref<3x128x128xbf16, #tpu.memory_space<vmem>>, vector<1x128x128xbf16>
    %17 = vector.shape_cast %16 : vector<1x128x128xbf16> to vector<128x128xbf16>
    %cst_11 = arith.constant dense<0.000000e+00> : vector<128x128xf32>
    %18 = tpu.matmul %15, %17, %cst_11 {dimension_numbers = #tpu.dot_dimension_numbers<[1], [0], [0], [1], [0, 0, 1, 1], [], []>} : vector<128x128xbf16>, vector<128x128xbf16>, vector<128x128xf32> -> vector<128x128xf32>
    %19 = arith.addf %10, %18 : vector<128x128xf32>
    %c2_i32 = arith.constant 2 : i32
    %20 = arith.addi %0, %c2_i32 : i32
    %c0_12 = arith.constant 0 : index
    %21 = arith.index_cast %20 : i32 to index
    %c0_13 = arith.constant 0 : index
    %c0_14 = arith.constant 0 : index
    %22 = vector.load %arg2[%c0_12, %21, %c0_13, %c0_14] : memref<1x18x16x128xbf16, #tpu.memory_space<vmem>>, vector<1x8x16x128xbf16>
    %23 = vector.shape_cast %22 : vector<1x8x16x128xbf16> to vector<8x16x128xbf16>
    %24 = vector.shape_cast %23 : vector<8x16x128xbf16> to vector<128x128xbf16>
    %c2 = arith.constant 2 : index
    %c0_15 = arith.constant 0 : index
    %c0_16 = arith.constant 0 : index
    %25 = vector.load %arg3[%c2, %c0_15, %c0_16] : memref<3x128x128xbf16, #tpu.memory_space<vmem>>, vector<1x128x128xbf16>
    %26 = vector.shape_cast %25 : vector<1x128x128xbf16> to vector<128x128xbf16>
    %cst_17 = arith.constant dense<0.000000e+00> : vector<128x128xf32>
    %27 = tpu.matmul %24, %26, %cst_17 {dimension_numbers = #tpu.dot_dimension_numbers<[1], [0], [0], [1], [0, 0, 1, 1], [], []>} : vector<128x128xbf16>, vector<128x128xbf16>, vector<128x128xf32> -> vector<128x128xf32>
    %28 = arith.addf %19, %27 : vector<128x128xf32>
    %c0_18 = arith.constant 0 : index
    %c0_19 = arith.constant 0 : index
    %29 = vector.load %arg4[%c0_18, %c0_19] : memref<1x128xf32, #tpu.memory_space<vmem>>, vector<1x128xf32>
    %30 = vector.shape_cast %29 : vector<1x128xf32> to vector<128xf32>
    %31 = vector.shape_cast %30 : vector<128xf32> to vector<1x128xf32>
    %32 = vector.broadcast %31 : vector<1x128xf32> to vector<128x128xf32>
    %33 = arith.addf %28, %32 : vector<128x128xf32>
    %cst_20 = arith.constant 0.000000e+00 : f32
    %34 = vector.broadcast %cst_20 : f32 to vector<128x128xf32>
    %35 = arith.cmpf ogt, %33, %34 : vector<128x128xf32>
    %cst_21 = arith.constant 1.000000e-01 : f32
    %36 = vector.broadcast %cst_21 : f32 to vector<128x128xf32>
    %37 = arith.mulf %36, %33 : vector<128x128xf32>
    %38 = arith.select %35, %33, %37 : vector<128x128xi1>, vector<128x128xf32>
    %c0_22 = arith.constant 0 : index
    %c0_23 = arith.constant 0 : index
    %39 = vector.load %arg5[%c0_22, %c0_23] : memref<128x128xf32, #tpu.memory_space<vmem>>, vector<128x128xf32>
    %cst_24 = arith.constant dense<0.000000e+00> : vector<128x128xf32>
    %40 = tpu.matmul %38, %39, %cst_24 {dimension_numbers = #tpu.dot_dimension_numbers<[1], [0], [0], [1], [0, 0, 1, 1], [], []>} : vector<128x128xf32>, vector<128x128xf32>, vector<128x128xf32> -> vector<128x128xf32>
    %c0_25 = arith.constant 0 : index
    %c0_26 = arith.constant 0 : index
    %41 = vector.load %arg6[%c0_25, %c0_26] : memref<1x128xf32, #tpu.memory_space<vmem>>, vector<1x128xf32>
    %42 = vector.shape_cast %41 : vector<1x128xf32> to vector<128xf32>
    %43 = vector.shape_cast %42 : vector<128xf32> to vector<1x128xf32>
    %44 = vector.broadcast %43 : vector<1x128xf32> to vector<128x128xf32>
    %45 = arith.addf %40, %44 : vector<128x128xf32>
    %46 = vector.shape_cast %45 : vector<128x128xf32> to vector<1x8x16x128xf32>
    %c0_27 = arith.constant 0 : index
    %c0_28 = arith.constant 0 : index
    %c0_29 = arith.constant 0 : index
    %c0_30 = arith.constant 0 : index
    %47 = vector.load %arg7[%c0_27, %c0_28, %c0_29, %c0_30] : memref<1x8x16x128xf32, #tpu.memory_space<vmem>>, vector<1x8x16x128xf32>
    tpu.vector_store %arg7[%c0_27, %c0_28, %c0_29, %c0_30], %46 {strides = array<i32>} : memref<1x8x16x128xf32, #tpu.memory_space<vmem>>, vector<1x8x16x128xf32>,
    return
  }
  func.func @transform_0(%arg0: i32, %arg1: i32) -> (i32, i32, i32, i32) {
    %c0_i32 = arith.constant 0 : i32
    %c0_i32_0 = arith.constant 0 : i32
    %c0_i32_1 = arith.constant 0 : i32
    %c0_i32_2 = arith.constant 0 : i32
    return %arg0, %c0_i32, %c0_i32_0, %c0_i32_1 : i32, i32, i32, i32
  }
  func.func @transform_1(%arg0: i32, %arg1: i32) -> (i32, i32, i32) {
    %c0_i32 = arith.constant 0 : i32
    %c0_i32_0 = arith.constant 0 : i32
    %c0_i32_1 = arith.constant 0 : i32
    %c0_i32_2 = arith.constant 0 : i32
    return %c0_i32, %c0_i32_0, %c0_i32_1 : i32, i32, i32
  }
  func.func @transform_2(%arg0: i32, %arg1: i32) -> (i32, i32) {
    %c0_i32 = arith.constant 0 : i32
    %c0_i32_0 = arith.constant 0 : i32
    %c0_i32_1 = arith.constant 0 : i32
    return %c0_i32, %c0_i32_0 : i32, i32
  }
  func.func @transform_3(%arg0: i32, %arg1: i32) -> (i32, i32) {
    %c0_i32 = arith.constant 0 : i32
    %c0_i32_0 = arith.constant 0 : i32
    %c0_i32_1 = arith.constant 0 : i32
    return %c0_i32, %c0_i32_0 : i32, i32
  }
  func.func @transform_4(%arg0: i32, %arg1: i32) -> (i32, i32) {
    %c0_i32 = arith.constant 0 : i32
    %c0_i32_0 = arith.constant 0 : i32
    %c0_i32_1 = arith.constant 0 : i32
    return %c0_i32, %c0_i32_0 : i32, i32
  }
  func.func @transform_5(%arg0: i32, %arg1: i32) -> (i32, i32, i32, i32) {
    %c0_i32 = arith.constant 0 : i32
    %c0_i32_0 = arith.constant 0 : i32
    %c0_i32_1 = arith.constant 0 : i32
    return %arg0, %arg1, %c0_i32, %c0_i32_0 : i32, i32, i32, i32
  }
}

</mosaic_0001>

<llo_original>
// kernel: tpu_custom_call.1
$region0: #{tpu_custom_call.1}
  #allocation0 [shape = 'u32[]', space=smem, size = 0x4, offset = 0x4, fixed_abs, tag = 'smem constant byte address 0x4 - core index']
  #allocation1 [shape = 'u32[144,128]{1,0:T(1,128)}', space=vmem, size = 0x12000, scoped, tag = 'internal scratch']
  %s0 = inlined_call_operand.hbm [shape: bf16[2,18,16,128], index: 0, kind: input, shape index: {}]
  %s1 = inlined_call_operand.hbm [shape: bf16[3,128,128], index: 1, kind: input, shape index: {}]
  %s2 = inlined_call_operand.vmem [shape: f32[1,128], index: 2, kind: input, shape index: {}]
  %s3 = inlined_call_operand.hbm [shape: f32[128,128], index: 3, kind: input, shape index: {}]
  %s4 = inlined_call_operand.vmem [shape: f32[1,128], index: 4, kind: input, shape index: {}]
  %s5 = inlined_call_operand.hbm [shape: f32[2,16,16,128], index: 5, kind: output, shape index: {}]
  %s6 = sld [smem:[#allocation0]]
  $region65: #{tpu_custom_call.1} parent=0
    _
  %s8 = ssub.s32 1, %s6
  %s9 = scalar_select 0, %s8, %s6
  $region1: #{tpu_custom_call.1} parent=0
    #allocation2 [shape = 'u8[147456]{0}', space=vmem, size = 0x24000, scoped, tag = 'input window, operand 0']
    #allocation3 [shape = 's32[2]{0}', space=sflag, size = 0x8, scoped, tag = 'scoped memory for tpu_custom_call.1']
    #allocation4 [shape = 's32[2]{0}', space=sflag, size = 0x8, scoped, tag = 'scoped memory for tpu_custom_call.1']
    #allocation5 [shape = 'u8[98304]{0}', space=vmem, size = 0x18000, scoped, tag = 'input window, operand 1, single buffered']
    #allocation6 [shape = 's32[1]{0}', space=sflag, size = 0x4, scoped, tag = 'scoped memory for tpu_custom_call.1']
    #allocation7 [shape = 'u8[65536]{0}', space=vmem, size = 0x10000, scoped, tag = 'input window, operand 3, single buffered']
    #allocation8 [shape = 'u8[131072]{0}', space=vmem, size = 0x20000, scoped, tag = 'output window, operand 0']
    %10 = vsyncpa [#allocation3], 0
    %s11 = scalar_lea.sflag [#allocation3], 1
    %12 = vsyncpa %s11, 0
    %13 = vsyncpa [#allocation6], 0
    %14 = vsyncpa [#allocation4], 0
    %s15 = scalar_lea.sflag [#allocation4], 1
    %16 = vsyncpa %s15, 0
    loop: start=0, step=1, limit=6
    $region2: #{tpu_custom_call.1} parent=1 // loop_pre_header
      _
    $region3: #{tpu_custom_call.1} parent=1 // loop_header
      %s18 = sphi 0, %s22
      %p19 = scmp.ge.s32.totalorder %s18, 6
      %s25 = sphi 0, %s37
      %s26 = sphi 0, %s33
      %s27 = sphi 0, %s25
      %s28 = sphi 0, %s26
      %s29 = sphi 0, %s27
      %s30 = sphi 0, %s28
      %s40 = sphi 0, %s42
      %s43 = sphi 0, %s40
      %s44 = sphi 0, %s43
      %s60 = sphi 0, %s44
      %s64 = sphi 0, %s64
      %s66 = sphi 0, %s64
      %s67 = sphi 0, %s66
      %s81 = sphi 0, %s67
      %s85 = sphi 0, %s85
      %s87 = sphi 0, %s85
      %s88 = sphi 0, %s87
      %s102 = sphi 0, %s88
      %s106 = sphi 0, %s106
      %s108 = sphi 0, %s106
      %s109 = sphi 0, %s108
      %s123 = sphi 0, %s109
      %s127 = sphi 0, %s127
      %s129 = sphi 0, %s127
      %s130 = sphi 0, %s129
      %s144 = sphi 0, %s130
      %s152 = sphi 0, %s154
      %s155 = sphi 0, %s152
      %s156 = sphi 0, %s155
      %s172 = sphi 0, %s156
    $region4: #{tpu_custom_call.1} parent=1 // loop_header_branch
      %21 = sbr.rel (%p19) target = $region8
    $region5: #{tpu_custom_call.1} parent=1 // loop_body
      %s23 = ssub.s32 %s18, 1
      %s24 = ssub.s32 %s18, 2
      %s31 = sadd.s32 1, %s26
      %p32 = scmp.ge.s32.totalorder %s31, 2
      %s33 = scalar_select %p32, 0, %s31
      %s34 = sadd.s32 1, %s25
      %s35 = scalar_select %p32, %s34, %s25
      %p36 = scmp.ge.s32.totalorder %s35, 2
      %s37 = scalar_select %p36, 0, %s35
      %s38 = ssub.s32 %s25, %s37
      %p39 = scmp.eq.s32.totalorder %s38, 0
      %s41 = sadd.s32 %s40, 1
      %s42 = scalar_select %p39, %s40, %s41
      %p45 = pneg %p39
      %p46 = scmp.eq.s32.totalorder %s18, 3
      %p47 = por %p45, %p46
      %p48 = scmp.ne.s32.totalorder %s40, %s43
      %p49 = scmp.eq.s32.totalorder %s18, 0
      %p50 = por %p48, %p49
      %p51 = scmp.ne.s32.totalorder %s40, %s43
      %p52 = scmp.eq.s32.totalorder %s23, 3
      %p53 = por %p51, %p52
      %p54 = scmp.ne.s32.totalorder %s43, %s44
      %p55 = scmp.eq.s32.totalorder %s23, 0
      %p56 = por %p54, %p55
      %p57 = scmp.ne.s32.totalorder %s43, %s44
      %p58 = scmp.eq.s32.totalorder %s24, 3
      %p59 = por %p57, %p58
      %p61 = scmp.ne.s32.totalorder %s44, %s60
      %p62 = scmp.eq.s32.totalorder %s24, 0
      %p63 = por %p61, %p62
      %s65 = sadd.s32 %s64, 1
      %p68 = scmp.eq.s32.totalorder %s18, 3
      %p69 = scmp.ne.s32.totalorder %s64, %s66
      %p70 = scmp.eq.s32.totalorder %s18, 0
      %p71 = por %p69, %p70
      %p72 = scmp.ne.s32.totalorder %s64, %s66
      %p73 = scmp.eq.s32.totalorder %s23, 3
      %p74 = por %p72, %p73
      %p75 = scmp.ne.s32.totalorder %s66, %s67
      %p76 = scmp.eq.s32.totalorder %s23, 0
      %p77 = por %p75, %p76
      %p78 = scmp.ne.s32.totalorder %s66, %s67
      %p79 = scmp.eq.s32.totalorder %s24, 3
      %p80 = por %p78, %p79
      %p82 = scmp.ne.s32.totalorder %s67, %s81
      %p83 = scmp.eq.s32.totalorder %s24, 0
      %p84 = por %p82, %p83
      %s86 = sadd.s32 %s85, 1
      %p89 = scmp.eq.s32.totalorder %s18, 3
      %p90 = scmp.ne.s32.totalorder %s85, %s87
      %p91 = scmp.eq.s32.totalorder %s18, 0
      %p92 = por %p90, %p91
      %p93 = scmp.ne.s32.totalorder %s85, %s87
      %p94 = scmp.eq.s32.totalorder %s23, 3
      %p95 = por %p93, %p94
      %p96 = scmp.ne.s32.totalorder %s87, %s88
      %p97 = scmp.eq.s32.totalorder %s23, 0
      %p98 = por %p96, %p97
      %p99 = scmp.ne.s32.totalorder %s87, %s88
      %p100 = scmp.eq.s32.totalorder %s24, 3
      %p101 = por %p99, %p100
      %p103 = scmp.ne.s32.totalorder %s88, %s102
      %p104 = scmp.eq.s32.totalorder %s24, 0
      %p105 = por %p103, %p104
      %s107 = sadd.s32 %s106, 1
      %p110 = scmp.eq.s32.totalorder %s18, 3
      %p111 = scmp.ne.s32.totalorder %s106, %s108
      %p112 = scmp.eq.s32.totalorder %s18, 0
      %p113 = por %p111, %p112
      %p114 = scmp.ne.s32.totalorder %s106, %s108
      %p115 = scmp.eq.s32.totalorder %s23, 3
      %p116 = por %p114, %p115
      %p117 = scmp.ne.s32.totalorder %s108, %s109
      %p118 = scmp.eq.s32.totalorder %s23, 0
      %p119 = por %p117, %p118
      %p120 = scmp.ne.s32.totalorder %s108, %s109
      %p121 = scmp.eq.s32.totalorder %s24, 3
      %p122 = por %p120, %p121
      %p124 = scmp.ne.s32.totalorder %s109, %s123
      %p125 = scmp.eq.s32.totalorder %s24, 0
      %p126 = por %p124, %p125
      %s128 = sadd.s32 %s127, 1
      %p131 = scmp.eq.s32.totalorder %s18, 3
      %p132 = scmp.ne.s32.totalorder %s127, %s129
      %p133 = scmp.eq.s32.totalorder %s18, 0
      %p134 = por %p132, %p133
      %p135 = scmp.ne.s32.totalorder %s127, %s129
      %p136 = scmp.eq.s32.totalorder %s23, 3
      %p137 = por %p135, %p136
      %p138 = scmp.ne.s32.totalorder %s129, %s130
      %p139 = scmp.eq.s32.totalorder %s23, 0
      %p140 = por %p138, %p139
      %p141 = scmp.ne.s32.totalorder %s129, %s130
      %p142 = scmp.eq.s32.totalorder %s24, 3
      %p143 = por %p141, %p142
      %p145 = scmp.ne.s32.totalorder %s130, %s144
      %p146 = scmp.eq.s32.totalorder %s24, 0
      %p147 = por %p145, %p146
      %s148 = ssub.s32 %s25, %s37
      %s149 = ssub.s32 %s26, %s33
      %s150 = sor.u32 %s148, %s149
      %p151 = scmp.eq.s32.totalorder %s150, 0
      %s153 = sadd.s32 %s152, 1
      %s154 = scalar_select %p151, %s152, %s153
      %p157 = pneg %p151
      %p158 = scmp.eq.s32.totalorder %s18, 3
      %p159 = por %p157, %p158
      %p160 = scmp.ne.s32.totalorder %s152, %s155
      %p161 = scmp.eq.s32.totalorder %s18, 0
      %p162 = por %p160, %p161
      %p163 = scmp.ne.s32.totalorder %s152, %s155
      %p164 = scmp.eq.s32.totalorder %s23, 3
      %p165 = por %p163, %p164
      %p166 = scmp.ne.s32.totalorder %s155, %s156
      %p167 = scmp.eq.s32.totalorder %s23, 0
      %p168 = por %p166, %p167
      %p169 = scmp.ne.s32.totalorder %s155, %s156
      %p170 = scmp.eq.s32.totalorder %s24, 3
      %p171 = por %p169, %p170
      %p173 = scmp.ne.s32.totalorder %s156, %s172
      %p174 = scmp.eq.s32.totalorder %s24, 0
      %p175 = por %p173, %p174
      %p176 = scmp.le.s32.totalorder 1, %s18
      %p177 = scmp.lt.s32.totalorder %s18, 5
      %p178 = pnand %p176, %p177
      %p179 = pneg %p178
      // Predicated region
      $region9: #{tpu_custom_call.1} parent=5 // pred_check
        _
      $region10: #{tpu_custom_call.1} parent=5 // pred_check_branch
        %181 = sbr.rel (%p178) target = $region12
      $region11: #{tpu_custom_call.1} parent=5 // pred_region
        %s182 = ssub.s32 %s18, 1
        // Predicated region
        $region13: #{tpu_custom_call.1} parent=11 // pred_check
          %p183 = pneg %p77
        $region14: #{tpu_custom_call.1} parent=11 // pred_check_branch
          %185 = sbr.rel (%p183) target = $region16
        $region15: #{tpu_custom_call.1} parent=11 // pred_region
          %s187 = ssub.s32 3072, 3072
          %188 = vsyncadd [#allocation6], %s187
          %s189 = sshll.u32 [#allocation5], 4
          %s190 = int_to_ptr.vmem [resolvable:$true] %s189
          %195 = dma.hbm_to_vmem [thread:$0]  %s1, 3072, %s190, [#allocation6], 64, 64, 4
        $region16: #{tpu_custom_call.1} parent=11 // pred_fallthru
          _
        // Predicated region
        $region17: #{tpu_custom_call.1} parent=11 // pred_check
          %p196 = pneg %p98
        $region18: #{tpu_custom_call.1} parent=11 // pred_check_branch
          %198 = sbr.rel (%p196) target = $region20
        $region19: #{tpu_custom_call.1} parent=11 // pred_region
          _
        $region20: #{tpu_custom_call.1} parent=11 // pred_fallthru
          _
        // Predicated region
        $region21: #{tpu_custom_call.1} parent=11 // pred_check
          %p199 = pneg %p119
        $region22: #{tpu_custom_call.1} parent=11 // pred_check_branch
          %201 = sbr.rel (%p199) target = $region24
        $region23: #{tpu_custom_call.1} parent=11 // pred_region
          %s203 = ssub.s32 2048, 2048
          %204 = vsyncadd [#allocation6], %s203
          %s205 = sshll.u32 [#allocation7], 4
          %s206 = int_to_ptr.vmem [resolvable:$true] %s205
          %211 = dma.hbm_to_vmem [thread:$0]  %s3, 2048, %s206, [#allocation6], 128, 128, 8
        $region24: #{tpu_custom_call.1} parent=11 // pred_fallthru
          _
        // Predicated region
        $region25: #{tpu_custom_call.1} parent=11 // pred_check
          %p212 = pneg %p140
        $region26: #{tpu_custom_call.1} parent=11 // pred_check_branch
          %214 = sbr.rel (%p212) target = $region28
        $region27: #{tpu_custom_call.1} parent=11 // pred_region
          _
        $region28: #{tpu_custom_call.1} parent=11 // pred_fallthru
          _
      $region12: #{tpu_custom_call.1} parent=5 // pred_fallthru
        _
      %p215 = scmp.lt.s32.totalorder %s18, 4
      // Predicated region
      $region29: #{tpu_custom_call.1} parent=5 // pred_check
        %p216 = pneg %p215
      $region30: #{tpu_custom_call.1} parent=5 // pred_check_branch
        %218 = sbr.rel (%p216) target = $region32
      $region31: #{tpu_custom_call.1} parent=5 // pred_region
        // Predicated region
        $region33: #{tpu_custom_call.1} parent=31 // pred_check
          %p219 = pneg %p50
        $region34: #{tpu_custom_call.1} parent=31 // pred_check_branch
          %221 = sbr.rel (%p219) target = $region36
        $region35: #{tpu_custom_call.1} parent=31 // pred_region
          %s222 = sand.u32 %s40, 1
          %s223 = scalar_lea.sflag [#allocation3], %s222
          %s224 = sand.u32 %s40, 1
          %s225 = smul.addr %s224, 144
          %s226 = scalar_lea.vmem [#allocation2], %s225
          %s228 = ssub.s32 2304, 2304
          %229 = vsyncadd %s223, %s228
          %s230 = smul.addr %s25, 36
          %s231 = smul.addr %s230, 64
          %s232 = scalar_lea.hbm %s0, %s231
          %s233 = sshll.u32 %s226, 4
          %s234 = int_to_ptr.vmem [resolvable:$true] %s233
          %239 = dma.hbm_to_vmem [thread:$0]  %s232, 2304, %s234, %s223, 64, 64, 4
        $region36: #{tpu_custom_call.1} parent=31 // pred_fallthru
          _
      $region32: #{tpu_custom_call.1} parent=5 // pred_fallthru
        _
      %p240 = scmp.le.s32.totalorder 1, %s18
      %p241 = scmp.lt.s32.totalorder %s18, 5
      %p242 = pnand %p240, %p241
      %p243 = pneg %p242
      // Predicated region
      $region37: #{tpu_custom_call.1} parent=5 // pred_check
        _
      $region38: #{tpu_custom_call.1} parent=5 // pred_check_branch
        %245 = sbr.rel (%p242) target = $region40
      $region39: #{tpu_custom_call.1} parent=5 // pred_region
        %s246 = ssub.s32 %s18, 1
        %s247 = sand.u32 %s43, 1
        %s248 = scalar_lea.sflag [#allocation3], %s247
        %s249 = sand.u32 %s43, 1
        %s250 = smul.addr %s249, 144
        %s251 = scalar_lea.vmem [#allocation2], %s250
        // Predicated region
        $region41: #{tpu_custom_call.1} parent=39 // pred_check
          %p252 = pneg %p56
        $region42: #{tpu_custom_call.1} parent=39 // pred_check_branch
          %254 = sbr.rel (%p252) target = $region44
        $region43: #{tpu_custom_call.1} parent=39 // pred_region
          %255 = dma.done %s248, 2304
        $region44: #{tpu_custom_call.1} parent=39 // pred_fallthru
          _
        // Predicated region
        $region45: #{tpu_custom_call.1} parent=39 // pred_check
          %p256 = pneg %p77
        $region46: #{tpu_custom_call.1} parent=39 // pred_check_branch
          %258 = sbr.rel (%p256) target = $region48
        $region47: #{tpu_custom_call.1} parent=39 // pred_region
          %259 = dma.done [#allocation6], 3072
        $region48: #{tpu_custom_call.1} parent=39 // pred_fallthru
          _
        // Predicated region
        $region49: #{tpu_custom_call.1} parent=39 // pred_check
          %p260 = pneg %p119
        $region50: #{tpu_custom_call.1} parent=39 // pred_check_branch
          %262 = sbr.rel (%p260) target = $region52
        $region51: #{tpu_custom_call.1} parent=39 // pred_region
          %263 = dma.done [#allocation6], 2048
        $region52: #{tpu_custom_call.1} parent=39 // pred_fallthru
          _
        %s264 = sand.u32 %s43, 1
        %s265 = scalar_lea.sflag [#allocation3], %s264
        %s266 = sand.u32 %s43, 1
        %s267 = smul.addr %s266, 144
        %s268 = scalar_lea.vmem [#allocation2], %s267
        %p269 = pneg %p56
        %p270 = pneg %p53
        %p271 = pneg %p77
        %p272 = pneg %p74
        %p273 = pneg %p98
        %p274 = pneg %p95
        %p275 = pneg %p119
        %p276 = pneg %p116
        %p277 = pneg %p140
        %p278 = pneg %p137
        %p279 = pneg %p168
        %p280 = pneg %p165
        %s281 = sand.u32 %s155, 1
        %s282 = scalar_lea.sflag [#allocation4], %s281
        %s283 = sand.u32 %s155, 1
        %s284 = smul.addr %s283, 128
        %s285 = scalar_lea.vmem [#allocation8], %s284
        %s286 = smul.u32 8, %s28
        %s288 = smul.u32 %s28, 8
        %s289 = smul.u32 %s288, 2
        %s290 = smul.addr %s289, 4
        %s291 = scalar_lea.vmem %s251, %s290 [#allocation2]
        %v292 = vld [vmem:[%s291] sm:$0xf]
        %v293 = vld [vmem:[%s291 + $0x4] sm:$0xf]
        %v294 = vld [vmem:[%s291 + $0x8] sm:$0xf]
        %v295 = vld [vmem:[%s291 + $0xc] sm:$0xf]
        %v296 = vld [vmem:[%s291 + $0x10] sm:$0xf]
        %v297 = vld [vmem:[%s291 + $0x14] sm:$0xf]
        %v298 = vld [vmem:[%s291 + $0x18] sm:$0xf]
        %v299 = vld [vmem:[%s291 + $0x1c] sm:$0xf]
        %v300 = vld [vmem:[%s291 + $0x20] sm:$0xf]
        %v301 = vld [vmem:[%s291 + $0x24] sm:$0xf]
        %v302 = vld [vmem:[%s291 + $0x28] sm:$0xf]
        %v303 = vld [vmem:[%s291 + $0x2c] sm:$0xf]
        %v304 = vld [vmem:[%s291 + $0x30] sm:$0xf]
        %v305 = vld [vmem:[%s291 + $0x34] sm:$0xf]
        %v306 = vld [vmem:[%s291 + $0x38] sm:$0xf]
        %v307 = vld [vmem:[%s291 + $0x3c] sm:$0xf]
        %v308 = vld [vmem:[#allocation5] sm:$0xf]
        %v309 = vld [vmem:[#allocation5 + $0x4] sm:$0xf]
        %v310 = vld [vmem:[#allocation5 + $0x8] sm:$0xf]
        %v311 = vld [vmem:[#allocation5 + $0xc] sm:$0xf]
        %v312 = vld [vmem:[#allocation5 + $0x10] sm:$0xf]
        %v313 = vld [vmem:[#allocation5 + $0x14] sm:$0xf]
        %v314 = vld [vmem:[#allocation5 + $0x18] sm:$0xf]
        %v315 = vld [vmem:[#allocation5 + $0x1c] sm:$0xf]
        %v316 = vld [vmem:[#allocation5 + $0x20] sm:$0xf]
        %v317 = vld [vmem:[#allocation5 + $0x24] sm:$0xf]
        %v318 = vld [vmem:[#allocation5 + $0x28] sm:$0xf]
        %v319 = vld [vmem:[#allocation5 + $0x2c] sm:$0xf]
        %v320 = vld [vmem:[#allocation5 + $0x30] sm:$0xf]
        %v321 = vld [vmem:[#allocation5 + $0x34] sm:$0xf]
        %v322 = vld [vmem:[#allocation5 + $0x38] sm:$0xf]
        %v323 = vld [vmem:[#allocation5 + $0x3c] sm:$0xf]
        %s324 = sadd.s32 %s288, 1
        %s325 = smul.u32 %s324, 2
        %s326 = smul.addr %s325, 4
        %s327 = scalar_lea.vmem %s251, %s326 [#allocation2]
        %v328 = vld [vmem:[%s327] sm:$0xf]
        %v329 = vld [vmem:[%s327 + $0x4] sm:$0xf]
        %v330 = vld [vmem:[%s327 + $0x8] sm:$0xf]
        %v331 = vld [vmem:[%s327 + $0xc] sm:$0xf]
        %v332 = vld [vmem:[%s327 + $0x10] sm:$0xf]
        %v333 = vld [vmem:[%s327 + $0x14] sm:$0xf]
        %v334 = vld [vmem:[%s327 + $0x18] sm:$0xf]
        %v335 = vld [vmem:[%s327 + $0x1c] sm:$0xf]
        %v336 = vld [vmem:[%s327 + $0x20] sm:$0xf]
        %v337 = vld [vmem:[%s327 + $0x24] sm:$0xf]
        %v338 = vld [vmem:[%s327 + $0x28] sm:$0xf]
        %v339 = vld [vmem:[%s327 + $0x2c] sm:$0xf]
        %v340 = vld [vmem:[%s327 + $0x30] sm:$0xf]
        %v341 = vld [vmem:[%s327 + $0x34] sm:$0xf]
        %v342 = vld [vmem:[%s327 + $0x38] sm:$0xf]
        %v343 = vld [vmem:[%s327 + $0x3c] sm:$0xf]
        %s344 = scalar_lea.vmem [#allocation5], 64
        %v345 = vld [vmem:[%s344] sm:$0xf]
        %v346 = vld [vmem:[%s344 + $0x4] sm:$0xf]
        %v347 = vld [vmem:[%s344 + $0x8] sm:$0xf]
        %v348 = vld [vmem:[%s344 + $0xc] sm:$0xf]
        %v349 = vld [vmem:[%s344 + $0x10] sm:$0xf]
        %v350 = vld [vmem:[%s344 + $0x14] sm:$0xf]
        %v351 = vld [vmem:[%s344 + $0x18] sm:$0xf]
        %v352 = vld [vmem:[%s344 + $0x1c] sm:$0xf]
        %v353 = vld [vmem:[%s344 + $0x20] sm:$0xf]
        %v354 = vld [vmem:[%s344 + $0x24] sm:$0xf]
        %v355 = vld [vmem:[%s344 + $0x28] sm:$0xf]
        %v356 = vld [vmem:[%s344 + $0x2c] sm:$0xf]
        %v357 = vld [vmem:[%s344 + $0x30] sm:$0xf]
        %v358 = vld [vmem:[%s344 + $0x34] sm:$0xf]
        %v359 = vld [vmem:[%s344 + $0x38] sm:$0xf]
        %v360 = vld [vmem:[%s344 + $0x3c] sm:$0xf]
        %v377 = vunpack.c.l.b16 %v328
        %v378 = vunpack.c.l.b16 %v329
        %v379 = vunpack.c.l.b16 %v330
        %v380 = vunpack.c.l.b16 %v331
        %v381 = vunpack.c.l.b16 %v332
        %v382 = vunpack.c.l.b16 %v333
        %v383 = vunpack.c.l.b16 %v334
        %v384 = vunpack.c.l.b16 %v335
        %v385 = vunpack.c.l.b16 %v336
        %v386 = vunpack.c.l.b16 %v337
        %v387 = vunpack.c.l.b16 %v338
        %v388 = vunpack.c.l.b16 %v339
        %v389 = vunpack.c.l.b16 %v340
        %v390 = vunpack.c.l.b16 %v341
        %v391 = vunpack.c.l.b16 %v342
        %v392 = vunpack.c.l.b16 %v343
        %v393 = vpack.c.b16 %v378, %v377
        %v394 = vpack.c.b16 %v380, %v379
        %v395 = vpack.c.b16 %v382, %v381
        %v396 = vpack.c.b16 %v384, %v383
        %v397 = vpack.c.b16 %v386, %v385
        %v398 = vpack.c.b16 %v388, %v387
        %v399 = vpack.c.b16 %v390, %v389
        %v400 = vpack.c.b16 %v392, %v391
        %v425 = vunpack.c.l.b16 %v345
        %v426 = vunpack.c.l.b16 %v346
        %v427 = vunpack.c.l.b16 %v347
        %v428 = vunpack.c.l.b16 %v348
        %v429 = vunpack.c.l.b16 %v349
        %v430 = vunpack.c.l.b16 %v350
        %v431 = vunpack.c.l.b16 %v351
        %v432 = vunpack.c.l.b16 %v352
        %v433 = vunpack.c.l.b16 %v353
        %v434 = vunpack.c.l.b16 %v354
        %v435 = vunpack.c.l.b16 %v355
        %v436 = vunpack.c.l.b16 %v356
        %v437 = vunpack.c.l.b16 %v357
        %v438 = vunpack.c.l.b16 %v358
        %v439 = vunpack.c.l.b16 %v359
        %v440 = vunpack.c.l.b16 %v360
        %v441 = vpack.c.b16 %v426, %v425
        %v442 = vpack.c.b16 %v428, %v427
        %v443 = vpack.c.b16 %v430, %v429
        %v444 = vpack.c.b16 %v432, %v431
        %v445 = vpack.c.b16 %v434, %v433
        %v446 = vpack.c.b16 %v436, %v435
        %v447 = vpack.c.b16 %v438, %v437
        %v448 = vpack.c.b16 %v440, %v439
        %457 = vmatprep.subr.bf16.mxu0 0
        %458 = vmatpush1.bf16.msra.mxu0 %v441
        %459 = vmatprep.subr.bf16.mxu0 0
        %460 = vmatpush1.bf16.msra.mxu0 %v442
        %461 = vmatprep.subr.bf16.mxu0 0
        %462 = vmatpush1.bf16.msra.mxu0 %v443
        %463 = vmatprep.subr.bf16.mxu0 0
        %464 = vmatpush1.bf16.msra.mxu0 %v444
        %465 = vmatprep.subr.bf16.mxu0 0
        %466 = vmatpush1.bf16.msra.mxu0 %v445
        %467 = vmatprep.subr.bf16.mxu0 0
        %468 = vmatpush1.bf16.msra.mxu0 %v446
        %469 = vmatprep.subr.bf16.mxu0 0
        %470 = vmatpush1.bf16.msra.mxu0 %v447
        %471 = vmatprep.subr.bf16.mxu0 0
        %472 = vmatpush1.bf16.msra.mxu0 %v448
        %473 = vmatprep.subr.bf16.mxu0 0
        %474 = vmatpush1.bf16.msra.mxu0 0
        %475 = vmatprep.subr.bf16.mxu0 0
        %476 = vmatpush1.bf16.msra.mxu0 0
        %477 = vmatprep.subr.bf16.mxu0 0
        %478 = vmatpush1.bf16.msra.mxu0 0
        %479 = vmatprep.subr.bf16.mxu0 0
        %480 = vmatpush1.bf16.msra.mxu0 0
        %481 = vmatprep.subr.bf16.mxu0 0
        %482 = vmatpush1.bf16.msra.mxu0 0
        %483 = vmatprep.subr.bf16.mxu0 0
        %484 = vmatpush1.bf16.msra.mxu0 0
        %485 = vmatprep.subr.bf16.mxu0 0
        %486 = vmatpush1.bf16.msra.mxu0 0
        %487 = vmatprep.subr.bf16.mxu0 0
        %488 = vmatpush1.bf16.msra.mxu0 0
        %489 = vmatprep.mubr.bf16.mxu0 0
        %490 = vmatmul.mubr.bf16.gmra.mrb[0].mxu0 %v393
        %v491 = vpop.f32.mrb[0].mxu0
        %v492 = vadd.f32 0.0, %v491
        %v493 = vpop.f32.mrb[0].mxu0
        %v494 = vpop.f32.mrb[0].mxu0
        %v495 = vadd.f32 0.0, %v494
        %v496 = vpop.f32.mrb[0].mxu0
        %497 = vmatprep.mubr.bf16.mxu0 0
        %498 = vmatmul.mubr.bf16.gmra.mrb[0].mxu0 %v394
        %v499 = vpop.f32.mrb[0].mxu0
        %v500 = vadd.f32 0.0, %v499
        %v501 = vpop.f32.mrb[0].mxu0
        %v502 = vpop.f32.mrb[0].mxu0
        %v503 = vadd.f32 0.0, %v502
        %v504 = vpop.f32.mrb[0].mxu0
        %505 = vmatprep.mubr.bf16.mxu0 0
        %506 = vmatmul.mubr.bf16.gmra.mrb[0].mxu0 %v395
        %v507 = vpop.f32.mrb[0].mxu0
        %v508 = vadd.f32 0.0, %v507
        %v509 = vpop.f32.mrb[0].mxu0
        %v510 = vpop.f32.mrb[0].mxu0
        %v511 = vadd.f32 0.0, %v510
        %v512 = vpop.f32.mrb[0].mxu0
        %513 = vmatprep.mubr.bf16.mxu0 0
        %514 = vmatmul.mubr.bf16.gmra.mrb[0].mxu0 %v396
        %v515 = vpop.f32.mrb[0].mxu0
        %v516 = vadd.f32 0.0, %v515
        %v517 = vpop.f32.mrb[0].mxu0
        %v518 = vpop.f32.mrb[0].mxu0
        %v519 = vadd.f32 0.0, %v518
        %v520 = vpop.f32.mrb[0].mxu0
        %521 = vmatprep.mubr.bf16.mxu0 0
        %522 = vmatmul.mubr.bf16.gmra.mrb[0].mxu0 %v397
        %v523 = vpop.f32.mrb[0].mxu0
        %v524 = vadd.f32 0.0, %v523
        %v525 = vpop.f32.mrb[0].mxu0
        %v526 = vpop.f32.mrb[0].mxu0
        %v527 = vadd.f32 0.0, %v526
        %v528 = vpop.f32.mrb[0].mxu0
        %529 = vmatprep.mubr.bf16.mxu0 0
        %530 = vmatmul.mubr.bf16.gmra.mrb[0].mxu0 %v398
        %v531 = vpop.f32.mrb[0].mxu0
        %v532 = vadd.f32 0.0, %v531
        %v533 = vpop.f32.mrb[0].mxu0
        %v534 = vpop.f32.mrb[0].mxu0
        %v535 = vadd.f32 0.0, %v534
        %v536 = vpop.f32.mrb[0].mxu0
        %537 = vmatprep.mubr.bf16.mxu0 0
        %538 = vmatmul.mubr.bf16.gmra.mrb[0].mxu0 %v399
        %v539 = vpop.f32.mrb[0].mxu0
        %v540 = vadd.f32 0.0, %v539
        %v541 = vpop.f32.mrb[0].mxu0
        %v542 = vpop.f32.mrb[0].mxu0
        %v543 = vadd.f32 0.0, %v542
        %v544 = vpop.f32.mrb[0].mxu0
        %545 = vmatprep.mubr.bf16.mxu0 0
        %546 = vmatmul.mubr.bf16.gmra.mrb[0].mxu0 %v400
        %v547 = vpop.f32.mrb[0].mxu0
        %v548 = vadd.f32 0.0, %v547
        %v549 = vpop.f32.mrb[0].mxu0
        %v550 = vpop.f32.mrb[0].mxu0
        %v551 = vadd.f32 0.0, %v550
        %v552 = vpop.f32.mrb[0].mxu0
        %553 = vdwg.mxu0
        %v570 = vunpack.c.l.b16 %v292
        %v571 = vunpack.c.l.b16 %v293
        %v572 = vunpack.c.l.b16 %v294
        %v573 = vunpack.c.l.b16 %v295
        %v574 = vunpack.c.l.b16 %v296
        %v575 = vunpack.c.l.b16 %v297
        %v576 = vunpack.c.l.b16 %v298
        %v577 = vunpack.c.l.b16 %v299
        %v578 = vunpack.c.l.b16 %v300
        %v579 = vunpack.c.l.b16 %v301
        %v580 = vunpack.c.l.b16 %v302
        %v581 = vunpack.c.l.b16 %v303
        %v582 = vunpack.c.l.b16 %v304
        %v583 = vunpack.c.l.b16 %v305
        %v584 = vunpack.c.l.b16 %v306
        %v585 = vunpack.c.l.b16 %v307
        %v586 = vpack.c.b16 %v571, %v570
        %v587 = vpack.c.b16 %v573, %v572
        %v588 = vpack.c.b16 %v575, %v574
        %v589 = vpack.c.b16 %v577, %v576
        %v590 = vpack.c.b16 %v579, %v578
        %v591 = vpack.c.b16 %v581, %v580
        %v592 = vpack.c.b16 %v583, %v582
        %v593 = vpack.c.b16 %v585, %v584
        %v618 = vunpack.c.l.b16 %v308
        %v619 = vunpack.c.l.b16 %v309
        %v620 = vunpack.c.l.b16 %v310
        %v621 = vunpack.c.l.b16 %v311
        %v622 = vunpack.c.l.b16 %v312
        %v623 = vunpack.c.l.b16 %v313
        %v624 = vunpack.c.l.b16 %v314
        %v625 = vunpack.c.l.b16 %v315
        %v626 = vunpack.c.l.b16 %v316
        %v627 = vunpack.c.l.b16 %v317
        %v628 = vunpack.c.l.b16 %v318
        %v629 = vunpack.c.l.b16 %v319
        %v630 = vunpack.c.l.b16 %v320
        %v631 = vunpack.c.l.b16 %v321
        %v632 = vunpack.c.l.b16 %v322
        %v633 = vunpack.c.l.b16 %v323
        %v634 = vpack.c.b16 %v619, %v618
        %v635 = vpack.c.b16 %v621, %v620
        %v636 = vpack.c.b16 %v623, %v622
        %v637 = vpack.c.b16 %v625, %v624
        %v638 = vpack.c.b16 %v627, %v626
        %v639 = vpack.c.b16 %v629, %v628
        %v640 = vpack.c.b16 %v631, %v630
        %v641 = vpack.c.b16 %v633, %v632
        %650 = vmatprep.subr.bf16.mxu0 0
        %651 = vmatpush1.bf16.msra.mxu0 %v634
        %652 = vmatprep.subr.bf16.mxu0 0
        %653 = vmatpush1.bf16.msra.mxu0 %v635
        %654 = vmatprep.subr.bf16.mxu0 0
        %655 = vmatpush1.bf16.msra.mxu0 %v636
        %656 = vmatprep.subr.bf16.mxu0 0
        %657 = vmatpush1.bf16.msra.mxu0 %v637
        %658 = vmatprep.subr.bf16.mxu0 0
        %659 = vmatpush1.bf16.msra.mxu0 %v638
        %660 = vmatprep.subr.bf16.mxu0 0
        %661 = vmatpush1.bf16.msra.mxu0 %v639
        %662 = vmatprep.subr.bf16.mxu0 0
        %663 = vmatpush1.bf16.msra.mxu0 %v640
        %664 = vmatprep.subr.bf16.mxu0 0
        %665 = vmatpush1.bf16.msra.mxu0 %v641
        %666 = vmatprep.subr.bf16.mxu0 0
        %667 = vmatpush1.bf16.msra.mxu0 0
        %668 = vmatprep.subr.bf16.mxu0 0
        %669 = vmatpush1.bf16.msra.mxu0 0
        %670 = vmatprep.subr.bf16.mxu0 0
        %671 = vmatpush1.bf16.msra.mxu0 0
        %672 = vmatprep.subr.bf16.mxu0 0
        %673 = vmatpush1.bf16.msra.mxu0 0
        %674 = vmatprep.subr.bf16.mxu0 0
        %675 = vmatpush1.bf16.msra.mxu0 0
        %676 = vmatprep.subr.bf16.mxu0 0
        %677 = vmatpush1.bf16.msra.mxu0 0
        %678 = vmatprep.subr.bf16.mxu0 0
        %679 = vmatpush1.bf16.msra.mxu0 0
        %680 = vmatprep.subr.bf16.mxu0 0
        %681 = vmatpush1.bf16.msra.mxu0 0
        %682 = vmatprep.mubr.bf16.mxu0 0
        %683 = vmatmul.mubr.bf16.gmra.mrb[0].mxu0 %v586
        %v684 = vpop.f32.mrb[0].mxu0
        %v685 = vadd.f32 %v492, %v684
        %v686 = vpop.f32.mrb[0].mxu0
        %v687 = vpop.f32.mrb[0].mxu0
        %v688 = vadd.f32 %v495, %v687
        %v689 = vpop.f32.mrb[0].mxu0
        %690 = vmatprep.mubr.bf16.mxu0 0
        %691 = vmatmul.mubr.bf16.gmra.mrb[0].mxu0 %v587
        %v692 = vpop.f32.mrb[0].mxu0
        %v693 = vadd.f32 %v500, %v692
        %v694 = vpop.f32.mrb[0].mxu0
        %v695 = vpop.f32.mrb[0].mxu0
        %v696 = vadd.f32 %v503, %v695
        %v697 = vpop.f32.mrb[0].mxu0
        %698 = vmatprep.mubr.bf16.mxu0 0
        %699 = vmatmul.mubr.bf16.gmra.mrb[0].mxu0 %v588
        %v700 = vpop.f32.mrb[0].mxu0
        %v701 = vadd.f32 %v508, %v700
        %v702 = vpop.f32.mrb[0].mxu0
        %v703 = vpop.f32.mrb[0].mxu0
        %v704 = vadd.f32 %v511, %v703
        %v705 = vpop.f32.mrb[0].mxu0
        %706 = vmatprep.mubr.bf16.mxu0 0
        %707 = vmatmul.mubr.bf16.gmra.mrb[0].mxu0 %v589
        %v708 = vpop.f32.mrb[0].mxu0
        %v709 = vadd.f32 %v516, %v708
        %v710 = vpop.f32.mrb[0].mxu0
        %v711 = vpop.f32.mrb[0].mxu0
        %v712 = vadd.f32 %v519, %v711
        %v713 = vpop.f32.mrb[0].mxu0
        %714 = vmatprep.mubr.bf16.mxu0 0
        %715 = vmatmul.mubr.bf16.gmra.mrb[0].mxu0 %v590
        %v716 = vpop.f32.mrb[0].mxu0
        %v717 = vadd.f32 %v524, %v716
        %v718 = vpop.f32.mrb[0].mxu0
        %v719 = vpop.f32.mrb[0].mxu0
        %v720 = vadd.f32 %v527, %v719
        %v721 = vpop.f32.mrb[0].mxu0
        %722 = vmatprep.mubr.bf16.mxu0 0
        %723 = vmatmul.mubr.bf16.gmra.mrb[0].mxu0 %v591
        %v724 = vpop.f32.mrb[0].mxu0
        %v725 = vadd.f32 %v532, %v724
        %v726 = vpop.f32.mrb[0].mxu0
        %v727 = vpop.f32.mrb[0].mxu0
        %v728 = vadd.f32 %v535, %v727
        %v729 = vpop.f32.mrb[0].mxu0
        %730 = vmatprep.mubr.bf16.mxu0 0
        %731 = vmatmul.mubr.bf16.gmra.mrb[0].mxu0 %v592
        %v732 = vpop.f32.mrb[0].mxu0
        %v733 = vadd.f32 %v540, %v732
        %v734 = vpop.f32.mrb[0].mxu0
        %v735 = vpop.f32.mrb[0].mxu0
        %v736 = vadd.f32 %v543, %v735
        %v737 = vpop.f32.mrb[0].mxu0
        %738 = vmatprep.mubr.bf16.mxu0 0
        %739 = vmatmul.mubr.bf16.gmra.mrb[0].mxu0 %v593
        %v740 = vpop.f32.mrb[0].mxu0
        %v741 = vadd.f32 %v548, %v740
        %v742 = vpop.f32.mrb[0].mxu0
        %v743 = vpop.f32.mrb[0].mxu0
        %v744 = vadd.f32 %v551, %v743
        %v745 = vpop.f32.mrb[0].mxu0
        %746 = vdwg.mxu0
        %s747 = sadd.s32 %s288, 2
        %s748 = smul.u32 %s747, 2
        %s749 = smul.addr %s748, 4
        %s750 = scalar_lea.vmem %s251, %s749 [#allocation2]
        %v751 = vld [vmem:[%s750] sm:$0xf]
        %v752 = vld [vmem:[%s750 + $0x4] sm:$0xf]
        %v753 = vld [vmem:[%s750 + $0x8] sm:$0xf]
        %v754 = vld [vmem:[%s750 + $0xc] sm:$0xf]
        %v755 = vld [vmem:[%s750 + $0x10] sm:$0xf]
        %v756 = vld [vmem:[%s750 + $0x14] sm:$0xf]
        %v757 = vld [vmem:[%s750 + $0x18] sm:$0xf]
        %v758 = vld [vmem:[%s750 + $0x1c] sm:$0xf]
        %v759 = vld [vmem:[%s750 + $0x20] sm:$0xf]
        %v760 = vld [vmem:[%s750 + $0x24] sm:$0xf]
        %v761 = vld [vmem:[%s750 + $0x28] sm:$0xf]
        %v762 = vld [vmem:[%s750 + $0x2c] sm:$0xf]
        %v763 = vld [vmem:[%s750 + $0x30] sm:$0xf]
        %v764 = vld [vmem:[%s750 + $0x34] sm:$0xf]
        %v765 = vld [vmem:[%s750 + $0x38] sm:$0xf]
        %v766 = vld [vmem:[%s750 + $0x3c] sm:$0xf]
        %s767 = scalar_lea.vmem [#allocation5], 128
        %v768 = vld [vmem:[%s767] sm:$0xf]
        %v769 = vld [vmem:[%s767 + $0x4] sm:$0xf]
        %v770 = vld [vmem:[%s767 + $0x8] sm:$0xf]
        %v771 = vld [vmem:[%s767 + $0xc] sm:$0xf]
        %v772 = vld [vmem:[%s767 + $0x10] sm:$0xf]
        %v773 = vld [vmem:[%s767 + $0x14] sm:$0xf]
        %v774 = vld [vmem:[%s767 + $0x18] sm:$0xf]
        %v775 = vld [vmem:[%s767 + $0x1c] sm:$0xf]
        %v776 = vld [vmem:[%s767 + $0x20] sm:$0xf]
        %v777 = vld [vmem:[%s767 + $0x24] sm:$0xf]
        %v778 = vld [vmem:[%s767 + $0x28] sm:$0xf]
        %v779 = vld [vmem:[%s767 + $0x2c] sm:$0xf]
        %v780 = vld [vmem:[%s767 + $0x30] sm:$0xf]
        %v781 = vld [vmem:[%s767 + $0x34] sm:$0xf]
        %v782 = vld [vmem:[%s767 + $0x38] sm:$0xf]
        %v783 = vld [vmem:[%s767 + $0x3c] sm:$0xf]
        %v800 = vunpack.c.l.b16 %v751
        %v801 = vunpack.c.l.b16 %v752
        %v802 = vunpack.c.l.b16 %v753
        %v803 = vunpack.c.l.b16 %v754
        %v804 = vunpack.c.l.b16 %v755
        %v805 = vunpack.c.l.b16 %v756
        %v806 = vunpack.c.l.b16 %v757
        %v807 = vunpack.c.l.b16 %v758
        %v808 = vunpack.c.l.b16 %v759
        %v809 = vunpack.c.l.b16 %v760
        %v810 = vunpack.c.l.b16 %v761
        %v811 = vunpack.c.l.b16 %v762
        %v812 = vunpack.c.l.b16 %v763
        %v813 = vunpack.c.l.b16 %v764
        %v814 = vunpack.c.l.b16 %v765
        %v815 = vunpack.c.l.b16 %v766
        %v816 = vpack.c.b16 %v801, %v800
        %v817 = vpack.c.b16 %v803, %v802
        %v818 = vpack.c.b16 %v805, %v804
        %v819 = vpack.c.b16 %v807, %v806
        %v820 = vpack.c.b16 %v809, %v808
        %v821 = vpack.c.b16 %v811, %v810
        %v822 = vpack.c.b16 %v813, %v812
        %v823 = vpack.c.b16 %v815, %v814
        %v848 = vunpack.c.l.b16 %v768
        %v849 = vunpack.c.l.b16 %v769
        %v850 = vunpack.c.l.b16 %v770
        %v851 = vunpack.c.l.b16 %v771
        %v852 = vunpack.c.l.b16 %v772
        %v853 = vunpack.c.l.b16 %v773
        %v854 = vunpack.c.l.b16 %v774
        %v855 = vunpack.c.l.b16 %v775
        %v856 = vunpack.c.l.b16 %v776
        %v857 = vunpack.c.l.b16 %v777
        %v858 = vunpack.c.l.b16 %v778
        %v859 = vunpack.c.l.b16 %v779
        %v860 = vunpack.c.l.b16 %v780
        %v861 = vunpack.c.l.b16 %v781
        %v862 = vunpack.c.l.b16 %v782
        %v863 = vunpack.c.l.b16 %v783
        %v864 = vpack.c.b16 %v849, %v848
        %v865 = vpack.c.b16 %v851, %v850
        %v866 = vpack.c.b16 %v853, %v852
        %v867 = vpack.c.b16 %v855, %v854
        %v868 = vpack.c.b16 %v857, %v856
        %v869 = vpack.c.b16 %v859, %v858
        %v870 = vpack.c.b16 %v861, %v860
        %v871 = vpack.c.b16 %v863, %v862
        %880 = vmatprep.subr.bf16.mxu0 0
        %881 = vmatpush1.bf16.msra.mxu0 %v864
        %882 = vmatprep.subr.bf16.mxu0 0
        %883 = vmatpush1.bf16.msra.mxu0 %v865
        %884 = vmatprep.subr.bf16.mxu0 0
        %885 = vmatpush1.bf16.msra.mxu0 %v866
        %886 = vmatprep.subr.bf16.mxu0 0
        %887 = vmatpush1.bf16.msra.mxu0 %v867
        %888 = vmatprep.subr.bf16.mxu0 0
        %889 = vmatpush1.bf16.msra.mxu0 %v868
        %890 = vmatprep.subr.bf16.mxu0 0
        %891 = vmatpush1.bf16.msra.mxu0 %v869
        %892 = vmatprep.subr.bf16.mxu0 0
        %893 = vmatpush1.bf16.msra.mxu0 %v870
        %894 = vmatprep.subr.bf16.mxu0 0
        %895 = vmatpush1.bf16.msra.mxu0 %v871
        %896 = vmatprep.subr.bf16.mxu0 0
        %897 = vmatpush1.bf16.msra.mxu0 0
        %898 = vmatprep.subr.bf16.mxu0 0
        %899 = vmatpush1.bf16.msra.mxu0 0
        %900 = vmatprep.subr.bf16.mxu0 0
        %901 = vmatpush1.bf16.msra.mxu0 0
        %902 = vmatprep.subr.bf16.mxu0 0
        %903 = vmatpush1.bf16.msra.mxu0 0
        %904 = vmatprep.subr.bf16.mxu0 0
        %905 = vmatpush1.bf16.msra.mxu0 0
        %906 = vmatprep.subr.bf16.mxu0 0
        %907 = vmatpush1.bf16.msra.mxu0 0
        %908 = vmatprep.subr.bf16.mxu0 0
        %909 = vmatpush1.bf16.msra.mxu0 0
        %910 = vmatprep.subr.bf16.mxu0 0
        %911 = vmatpush1.bf16.msra.mxu0 0
        %912 = vmatprep.mubr.bf16.mxu0 0
        %913 = vmatmul.mubr.bf16.gmra.mrb[0].mxu0 %v816
        %v914 = vpop.f32.mrb[0].mxu0
        %v915 = vadd.f32 0.0, %v914
        %v916 = vpop.f32.mrb[0].mxu0
        %v917 = vpop.f32.mrb[0].mxu0
        %v918 = vadd.f32 0.0, %v917
        %v919 = vpop.f32.mrb[0].mxu0
        %920 = vmatprep.mubr.bf16.mxu0 0
        %921 = vmatmul.mubr.bf16.gmra.mrb[0].mxu0 %v817
        %v922 = vpop.f32.mrb[0].mxu0
        %v923 = vadd.f32 0.0, %v922
        %v924 = vpop.f32.mrb[0].mxu0
        %v925 = vpop.f32.mrb[0].mxu0
        %v926 = vadd.f32 0.0, %v925
        %v927 = vpop.f32.mrb[0].mxu0
        %928 = vmatprep.mubr.bf16.mxu0 0
        %929 = vmatmul.mubr.bf16.gmra.mrb[0].mxu0 %v818
        %v930 = vpop.f32.mrb[0].mxu0
        %v931 = vadd.f32 0.0, %v930
        %v932 = vpop.f32.mrb[0].mxu0
        %v933 = vpop.f32.mrb[0].mxu0
        %v934 = vadd.f32 0.0, %v933
        %v935 = vpop.f32.mrb[0].mxu0
        %936 = vmatprep.mubr.bf16.mxu0 0
        %937 = vmatmul.mubr.bf16.gmra.mrb[0].mxu0 %v819
        %v938 = vpop.f32.mrb[0].mxu0
        %v939 = vadd.f32 0.0, %v938
        %v940 = vpop.f32.mrb[0].mxu0
        %v941 = vpop.f32.mrb[0].mxu0
        %v942 = vadd.f32 0.0, %v941
        %v943 = vpop.f32.mrb[0].mxu0
        %944 = vmatprep.mubr.bf16.mxu0 0
        %945 = vmatmul.mubr.bf16.gmra.mrb[0].mxu0 %v820
        %v946 = vpop.f32.mrb[0].mxu0
        %v947 = vadd.f32 0.0, %v946
        %v948 = vpop.f32.mrb[0].mxu0
        %v949 = vpop.f32.mrb[0].mxu0
        %v950 = vadd.f32 0.0, %v949
        %v951 = vpop.f32.mrb[0].mxu0
        %952 = vmatprep.mubr.bf16.mxu0 0
        %953 = vmatmul.mubr.bf16.gmra.mrb[0].mxu0 %v821
        %v954 = vpop.f32.mrb[0].mxu0
        %v955 = vadd.f32 0.0, %v954
        %v956 = vpop.f32.mrb[0].mxu0
        %v957 = vpop.f32.mrb[0].mxu0
        %v958 = vadd.f32 0.0, %v957
        %v959 = vpop.f32.mrb[0].mxu0
        %960 = vmatprep.mubr.bf16.mxu0 0
        %961 = vmatmul.mubr.bf16.gmra.mrb[0].mxu0 %v822
        %v962 = vpop.f32.mrb[0].mxu0
        %v963 = vadd.f32 0.0, %v962
        %v964 = vpop.f32.mrb[0].mxu0
        %v965 = vpop.f32.mrb[0].mxu0
        %v966 = vadd.f32 0.0, %v965
        %v967 = vpop.f32.mrb[0].mxu0
        %968 = vmatprep.mubr.bf16.mxu0 0
        %969 = vmatmul.mubr.bf16.gmra.mrb[0].mxu0 %v823
        %v970 = vpop.f32.mrb[0].mxu0
        %v971 = vadd.f32 0.0, %v970
        %v972 = vpop.f32.mrb[0].mxu0
        %v973 = vpop.f32.mrb[0].mxu0
        %v974 = vadd.f32 0.0, %v973
        %v975 = vpop.f32.mrb[0].mxu0
        %976 = vdwg.mxu0
        %v977 = vadd.f32 %v685, %v915
        %v978 = vadd.f32 %v688, %v918
        %v979 = vadd.f32 %v693, %v923
        %v980 = vadd.f32 %v696, %v926
        %v981 = vadd.f32 %v701, %v931
        %v982 = vadd.f32 %v704, %v934
        %v983 = vadd.f32 %v709, %v939
        %v984 = vadd.f32 %v712, %v942
        %v985 = vadd.f32 %v717, %v947
        %v986 = vadd.f32 %v720, %v950
        %v987 = vadd.f32 %v725, %v955
        %v988 = vadd.f32 %v728, %v958
        %v989 = vadd.f32 %v733, %v963
        %v990 = vadd.f32 %v736, %v966
        %v991 = vadd.f32 %v741, %v971
        %v992 = vadd.f32 %v744, %v974
        %v993 = vld [vmem:[%s2] sm:$0x1]
        %v995 = vlaneseq
        %v996 = vshrl.u32 %v995, 7
        %v997 = vsub.s32 0, %v996
        %v998 = vrot.slane %v993, %v997
        %v1000 = vadd.f32 %v977, %v998
        %v1001 = vadd.f32 %v978, %v998
        %v1002 = vadd.f32 %v979, %v998
        %v1003 = vadd.f32 %v980, %v998
        %v1004 = vadd.f32 %v981, %v998
        %v1005 = vadd.f32 %v982, %v998
        %v1006 = vadd.f32 %v983, %v998
        %v1007 = vadd.f32 %v984, %v998
        %v1008 = vadd.f32 %v985, %v998
        %v1009 = vadd.f32 %v986, %v998
        %v1010 = vadd.f32 %v987, %v998
        %v1011 = vadd.f32 %v988, %v998
        %v1012 = vadd.f32 %v989, %v998
        %v1013 = vadd.f32 %v990, %v998
        %v1014 = vadd.f32 %v991, %v998
        %v1015 = vadd.f32 %v992, %v998
        %vm1016 = vcmp.gt.f32.partialorder %v1000, 0.0
        %vm1017 = vcmp.gt.f32.partialorder %v1001, 0.0
        %vm1018 = vcmp.gt.f32.partialorder %v1002, 0.0
        %vm1019 = vcmp.gt.f32.partialorder %v1003, 0.0
        %vm1020 = vcmp.gt.f32.partialorder %v1004, 0.0
        %vm1021 = vcmp.gt.f32.partialorder %v1005, 0.0
        %vm1022 = vcmp.gt.f32.partialorder %v1006, 0.0
        %vm1023 = vcmp.gt.f32.partialorder %v1007, 0.0
        %vm1024 = vcmp.gt.f32.partialorder %v1008, 0.0
        %vm1025 = vcmp.gt.f32.partialorder %v1009, 0.0
        %vm1026 = vcmp.gt.f32.partialorder %v1010, 0.0
        %vm1027 = vcmp.gt.f32.partialorder %v1011, 0.0
        %vm1028 = vcmp.gt.f32.partialorder %v1012, 0.0
        %vm1029 = vcmp.gt.f32.partialorder %v1013, 0.0
        %vm1030 = vcmp.gt.f32.partialorder %v1014, 0.0
        %vm1031 = vcmp.gt.f32.partialorder %v1015, 0.0
        %v1032 = vmul.f32 %v1000, 0.1
        %v1033 = vmul.f32 %v1001, 0.1
        %v1034 = vmul.f32 %v1002, 0.1
        %v1035 = vmul.f32 %v1003, 0.1
        %v1036 = vmul.f32 %v1004, 0.1
        %v1037 = vmul.f32 %v1005, 0.1
        %v1038 = vmul.f32 %v1006, 0.1
        %v1039 = vmul.f32 %v1007, 0.1
        %v1040 = vmul.f32 %v1008, 0.1
        %v1041 = vmul.f32 %v1009, 0.1
        %v1042 = vmul.f32 %v1010, 0.1
        %v1043 = vmul.f32 %v1011, 0.1
        %v1044 = vmul.f32 %v1012, 0.1
        %v1045 = vmul.f32 %v1013, 0.1
        %v1046 = vmul.f32 %v1014, 0.1
        %v1047 = vmul.f32 %v1015, 0.1
        %v1048 = vsel %vm1016, %v1000, %v1032
        %v1049 = vsel %vm1017, %v1001, %v1033
        %v1050 = vsel %vm1018, %v1002, %v1034
        %v1051 = vsel %vm1019, %v1003, %v1035
        %v1052 = vsel %vm1020, %v1004, %v1036
        %v1053 = vsel %vm1021, %v1005, %v1037
        %v1054 = vsel %vm1022, %v1006, %v1038
        %v1055 = vsel %vm1023, %v1007, %v1039
        %v1056 = vsel %vm1024, %v1008, %v1040
        %v1057 = vsel %vm1025, %v1009, %v1041
        %v1058 = vsel %vm1026, %v1010, %v1042
        %v1059 = vsel %vm1027, %v1011, %v1043
        %v1060 = vsel %vm1028, %v1012, %v1044
        %v1061 = vsel %vm1029, %v1013, %v1045
        %v1062 = vsel %vm1030, %v1014, %v1046
        %v1063 = vsel %vm1031, %v1015, %v1047
        %v1064 = vld [vmem:[#allocation7] sm:$0xff]
        %v1065 = vld [vmem:[#allocation7 + $0x8] sm:$0xff]
        %v1066 = vld [vmem:[#allocation7 + $0x10] sm:$0xff]
        %v1067 = vld [vmem:[#allocation7 + $0x18] sm:$0xff]
        %v1068 = vld [vmem:[#allocation7 + $0x20] sm:$0xff]
        %v1069 = vld [vmem:[#allocation7 + $0x28] sm:$0xff]
        %v1070 = vld [vmem:[#allocation7 + $0x30] sm:$0xff]
        %v1071 = vld [vmem:[#allocation7 + $0x38] sm:$0xff]
        %v1072 = vld [vmem:[#allocation7 + $0x40] sm:$0xff]
        %v1073 = vld [vmem:[#allocation7 + $0x48] sm:$0xff]
        %v1074 = vld [vmem:[#allocation7 + $0x50] sm:$0xff]
        %v1075 = vld [vmem:[#allocation7 + $0x58] sm:$0xff]
        %v1076 = vld [vmem:[#allocation7 + $0x60] sm:$0xff]
        %v1077 = vld [vmem:[#allocation7 + $0x68] sm:$0xff]
        %v1078 = vld [vmem:[#allocation7 + $0x70] sm:$0xff]
        %v1079 = vld [vmem:[#allocation7 + $0x78] sm:$0xff]
        %v1080 = vld [vmem:[%s4] sm:$0x1]
        %v1082 = vlaneseq
        %v1083 = vshrl.u32 %v1082, 7
        %v1084 = vsub.s32 0, %v1083
        %v1085 = vrot.slane %v1080, %v1084
        %1087 = vmatprep.subr.mxu0 0.0
        %1088 = vmatpush1.msra.mxu0 %v1064
        %1089 = vmatprep.subr.mxu0 0.0
        %1090 = vmatpush1.msra.mxu0 %v1065
        %1091 = vmatprep.subr.mxu0 0.0
        %1092 = vmatpush1.msra.mxu0 %v1066
        %1093 = vmatprep.subr.mxu0 0.0
        %1094 = vmatpush1.msra.mxu0 %v1067
        %1095 = vmatprep.subr.mxu0 0.0
        %1096 = vmatpush1.msra.mxu0 %v1068
        %1097 = vmatprep.subr.mxu0 0.0
        %1098 = vmatpush1.msra.mxu0 %v1069
        %1099 = vmatprep.subr.mxu0 0.0
        %1100 = vmatpush1.msra.mxu0 %v1070
        %1101 = vmatprep.subr.mxu0 0.0
        %1102 = vmatpush1.msra.mxu0 %v1071
        %1103 = vmatprep.subr.mxu0 0.0
        %1104 = vmatpush1.msra.mxu0 %v1072
        %1105 = vmatprep.subr.mxu0 0.0
        %1106 = vmatpush1.msra.mxu0 %v1073
        %1107 = vmatprep.subr.mxu0 0.0
        %1108 = vmatpush1.msra.mxu0 %v1074
        %1109 = vmatprep.subr.mxu0 0.0
        %1110 = vmatpush1.msra.mxu0 %v1075
        %1111 = vmatprep.subr.mxu0 0.0
        %1112 = vmatpush1.msra.mxu0 %v1076
        %1113 = vmatprep.subr.mxu0 0.0
        %1114 = vmatpush1.msra.mxu0 %v1077
        %1115 = vmatprep.subr.mxu0 0.0
        %1116 = vmatpush1.msra.mxu0 %v1078
        %1117 = vmatprep.subr.mxu0 0.0
        %1118 = vmatpush1.msra.mxu0 %v1079
        %1119 = vmatprep.subr.mxu0 0.0
        %1120 = vmatpush1.msra.mxu0 0.0
        %1121 = vmatprep.subr.mxu0 0.0
        %1122 = vmatpush1.msra.mxu0 0.0
        %1123 = vmatprep.subr.mxu0 0.0
        %1124 = vmatpush1.msra.mxu0 0.0
        %1125 = vmatprep.subr.mxu0 0.0
        %1126 = vmatpush1.msra.mxu0 0.0
        %1127 = vmatprep.subr.mxu0 0.0
        %1128 = vmatpush1.msra.mxu0 0.0
        %1129 = vmatprep.subr.mxu0 0.0
        %1130 = vmatpush1.msra.mxu0 0.0
        %1131 = vmatprep.subr.mxu0 0.0
        %1132 = vmatpush1.msra.mxu0 0.0
        %1133 = vmatprep.subr.mxu0 0.0
        %1134 = vmatpush1.msra.mxu0 0.0
        %1135 = vmatprep.subr.mxu0 0.0
        %1136 = vmatpush1.msra.mxu0 0.0
        %1137 = vmatprep.subr.mxu0 0.0
        %1138 = vmatpush1.msra.mxu0 0.0
        %1139 = vmatprep.subr.mxu0 0.0
        %1140 = vmatpush1.msra.mxu0 0.0
        %1141 = vmatprep.subr.mxu0 0.0
        %1142 = vmatpush1.msra.mxu0 0.0
        %1143 = vmatprep.subr.mxu0 0.0
        %1144 = vmatpush1.msra.mxu0 0.0
        %1145 = vmatprep.subr.mxu0 0.0
        %1146 = vmatpush1.msra.mxu0 0.0
        %1147 = vmatprep.subr.mxu0 0.0
        %1148 = vmatpush1.msra.mxu0 0.0
        %1149 = vmatprep.subr.mxu0 0.0
        %1150 = vmatpush1.msra.mxu0 0.0
        %1151 = vmatprep.mubr.f32.mxu0 0.0
        %1152 = vmatmul.mubr.f32.gmra.mrb[0].mxu0 %v1048
        %v1153 = vpop.f32.mrb[0].mxu0
        %v1154 = vadd.f32 %v1085, %v1153
        %v1155 = vpop.f32.mrb[0].mxu0
        %1156 = vmatprep.mubr.f32.mxu0 0.0
        %1157 = vmatmul.mubr.f32.gmra.mrb[0].mxu0 %v1049
        %v1158 = vpop.f32.mrb[0].mxu0
        %v1159 = vadd.f32 %v1085, %v1158
        %v1160 = vpop.f32.mrb[0].mxu0
        %1161 = vmatprep.mubr.f32.mxu0 0.0
        %1162 = vmatmul.mubr.f32.gmra.mrb[0].mxu0 %v1050
        %v1163 = vpop.f32.mrb[0].mxu0
        %v1164 = vadd.f32 %v1085, %v1163
        %v1165 = vpop.f32.mrb[0].mxu0
        %1166 = vmatprep.mubr.f32.mxu0 0.0
        %1167 = vmatmul.mubr.f32.gmra.mrb[0].mxu0 %v1051
        %v1168 = vpop.f32.mrb[0].mxu0
        %v1169 = vadd.f32 %v1085, %v1168
        %v1170 = vpop.f32.mrb[0].mxu0
        %1171 = vmatprep.mubr.f32.mxu0 0.0
        %1172 = vmatmul.mubr.f32.gmra.mrb[0].mxu0 %v1052
        %v1173 = vpop.f32.mrb[0].mxu0
        %v1174 = vadd.f32 %v1085, %v1173
        %v1175 = vpop.f32.mrb[0].mxu0
        %1176 = vmatprep.mubr.f32.mxu0 0.0
        %1177 = vmatmul.mubr.f32.gmra.mrb[0].mxu0 %v1053
        %v1178 = vpop.f32.mrb[0].mxu0
        %v1179 = vadd.f32 %v1085, %v1178
        %v1180 = vpop.f32.mrb[0].mxu0
        %1181 = vmatprep.mubr.f32.mxu0 0.0
        %1182 = vmatmul.mubr.f32.gmra.mrb[0].mxu0 %v1054
        %v1183 = vpop.f32.mrb[0].mxu0
        %v1184 = vadd.f32 %v1085, %v1183
        %v1185 = vpop.f32.mrb[0].mxu0
        %1186 = vmatprep.mubr.f32.mxu0 0.0
        %1187 = vmatmul.mubr.f32.gmra.mrb[0].mxu0 %v1055
        %v1188 = vpop.f32.mrb[0].mxu0
        %v1189 = vadd.f32 %v1085, %v1188
        %v1190 = vpop.f32.mrb[0].mxu0
        %1191 = vmatprep.mubr.f32.mxu0 0.0
        %1192 = vmatmul.mubr.f32.gmra.mrb[0].mxu0 %v1056
        %v1193 = vpop.f32.mrb[0].mxu0
        %v1194 = vadd.f32 %v1085, %v1193
        %v1195 = vpop.f32.mrb[0].mxu0
        %1196 = vmatprep.mubr.f32.mxu0 0.0
        %1197 = vmatmul.mubr.f32.gmra.mrb[0].mxu0 %v1057
        %v1198 = vpop.f32.mrb[0].mxu0
        %v1199 = vadd.f32 %v1085, %v1198
        %v1200 = vpop.f32.mrb[0].mxu0
        %1201 = vmatprep.mubr.f32.mxu0 0.0
        %1202 = vmatmul.mubr.f32.gmra.mrb[0].mxu0 %v1058
        %v1203 = vpop.f32.mrb[0].mxu0
        %v1204 = vadd.f32 %v1085, %v1203
        %v1205 = vpop.f32.mrb[0].mxu0
        %1206 = vmatprep.mubr.f32.mxu0 0.0
        %1207 = vmatmul.mubr.f32.gmra.mrb[0].mxu0 %v1059
        %v1208 = vpop.f32.mrb[0].mxu0
        %v1209 = vadd.f32 %v1085, %v1208
        %v1210 = vpop.f32.mrb[0].mxu0
        %1211 = vmatprep.mubr.f32.mxu0 0.0
        %1212 = vmatmul.mubr.f32.gmra.mrb[0].mxu0 %v1060
        %v1213 = vpop.f32.mrb[0].mxu0
        %v1214 = vadd.f32 %v1085, %v1213
        %v1215 = vpop.f32.mrb[0].mxu0
        %1216 = vmatprep.mubr.f32.mxu0 0.0
        %1217 = vmatmul.mubr.f32.gmra.mrb[0].mxu0 %v1061
        %v1218 = vpop.f32.mrb[0].mxu0
        %v1219 = vadd.f32 %v1085, %v1218
        %v1220 = vpop.f32.mrb[0].mxu0
        %1221 = vmatprep.mubr.f32.mxu0 0.0
        %1222 = vmatmul.mubr.f32.gmra.mrb[0].mxu0 %v1062
        %v1223 = vpop.f32.mrb[0].mxu0
        %v1224 = vadd.f32 %v1085, %v1223
        %v1225 = vpop.f32.mrb[0].mxu0
        %1226 = vmatprep.mubr.f32.mxu0 0.0
        %1227 = vmatmul.mubr.f32.gmra.mrb[0].mxu0 %v1063
        %v1228 = vpop.f32.mrb[0].mxu0
        %v1229 = vadd.f32 %v1085, %v1228
        %v1230 = vpop.f32.mrb[0].mxu0
        %1231 = vdwg.mxu0
        %1232 = vst [vmem:[%s285] sm:$0xff] %v1154
        %1233 = vst [vmem:[%s285 + $0x8] sm:$0xff] %v1159
        %1234 = vst [vmem:[%s285 + $0x10] sm:$0xff] %v1164
        %1235 = vst [vmem:[%s285 + $0x18] sm:$0xff] %v1169
        %1236 = vst [vmem:[%s285 + $0x20] sm:$0xff] %v1174
        %1237 = vst [vmem:[%s285 + $0x28] sm:$0xff] %v1179
        %1238 = vst [vmem:[%s285 + $0x30] sm:$0xff] %v1184
        %1239 = vst [vmem:[%s285 + $0x38] sm:$0xff] %v1189
        %1240 = vst [vmem:[%s285 + $0x40] sm:$0xff] %v1194
        %1241 = vst [vmem:[%s285 + $0x48] sm:$0xff] %v1199
        %1242 = vst [vmem:[%s285 + $0x50] sm:$0xff] %v1204
        %1243 = vst [vmem:[%s285 + $0x58] sm:$0xff] %v1209
        %1244 = vst [vmem:[%s285 + $0x60] sm:$0xff] %v1214
        %1245 = vst [vmem:[%s285 + $0x68] sm:$0xff] %v1219
        %1246 = vst [vmem:[%s285 + $0x70] sm:$0xff] %v1224
        %1247 = vst [vmem:[%s285 + $0x78] sm:$0xff] %v1229
        %s1248 = sand.u32 %s155, 1
        %s1249 = scalar_lea.sflag [#allocation4], %s1248
        %s1250 = sand.u32 %s155, 1
        %s1251 = smul.addr %s1250, 128
        %s1252 = scalar_lea.vmem [#allocation8], %s1251
        // Predicated region
        $region53: #{tpu_custom_call.1} parent=39 // pred_check
          %p1253 = pneg %p165
        $region54: #{tpu_custom_call.1} parent=39 // pred_check_branch
          %1255 = sbr.rel (%p1253) target = $region56
        $region55: #{tpu_custom_call.1} parent=39 // pred_region
          %s1256 = smul.u32 8, %s28
          %s1258 = ssub.s32 2048, 2048
          %1259 = vsyncadd %s1249, %s1258
          %s1260 = smul.addr %s1256, 2
          %s1261 = smul.addr %s27, 32
          %s1262 = sadd.s32 %s1260, %s1261
          %s1263 = smul.addr %s1262, 128
          %s1264 = scalar_lea.hbm %s5, %s1263
          %s1265 = sshll.u32 %s1252, 4
          %s1266 = int_to_ptr.vmem [resolvable:$true] %s1265
          %1271 = dma.vmem_to_hbm [thread:$0]  %s1266, 2048, %s1264, %s1249, 128, 128, 8
        $region56: #{tpu_custom_call.1} parent=39 // pred_fallthru
          _
      $region40: #{tpu_custom_call.1} parent=5 // pred_fallthru
        _
      %p1272 = scmp.le.s32.totalorder 2, %s18
      // Predicated region
      $region57: #{tpu_custom_call.1} parent=5 // pred_check
        %p1273 = pneg %p1272
      $region58: #{tpu_custom_call.1} parent=5 // pred_check_branch
        %1275 = sbr.rel (%p1273) target = $region60
      $region59: #{tpu_custom_call.1} parent=5 // pred_region
        %s1276 = ssub.s32 %s18, 2
        // Predicated region
        $region61: #{tpu_custom_call.1} parent=59 // pred_check
          %p1277 = pneg %p171
        $region62: #{tpu_custom_call.1} parent=59 // pred_check_branch
          %1279 = sbr.rel (%p1277) target = $region64
        $region63: #{tpu_custom_call.1} parent=59 // pred_region
          %s1280 = sand.u32 %s156, 1
          %s1281 = scalar_lea.sflag [#allocation4], %s1280
          %s1282 = sand.u32 %s156, 1
          %s1283 = smul.addr %s1282, 128
          %s1284 = scalar_lea.vmem [#allocation8], %s1283
          %1285 = dma.done %s1281, 2048
        $region64: #{tpu_custom_call.1} parent=59 // pred_fallthru
          _
      $region60: #{tpu_custom_call.1} parent=5 // pred_fallthru
        _
    $region6: #{tpu_custom_call.1} parent=1 // loop_footer
      %s22 = sadd.s32 1, %s18
    $region7: #{tpu_custom_call.1} parent=1 // loop_footer_branch
      %17 = sbr.rel target = $region3
    $region8: #{tpu_custom_call.1} parent=1 // loop_exit
      _
    %1286 = vsyncpa [#allocation3], 1
    %s1287 = scalar_lea.sflag [#allocation3], 1
    %1288 = vsyncpa %s1287, 1
    %1289 = vsyncpa [#allocation6], 1
    %1290 = vsyncpa [#allocation4], 1
    %s1291 = scalar_lea.sflag [#allocation4], 1
    %1292 = vsyncpa %s1291, 1

</llo_original>
